<compile_context>
chip_gen: v6e
topology: v6e:2x2x1
jax: 0.10.0
libtpu: 0.0.40
codegen_flags: <defaults>
</compile_context>

<pallas_src>
import functools

import jax
import jax.numpy as jnp
from jax.experimental import pallas as pl
from jax.experimental.pallas import tpu as pltpu

LANES = 128
TARGET_TILE_BYTES = 4 * 1024 * 1024    # ~4 MiB HBM traffic per input per grid step
CHUNK_ROWS = 512                       # inner sub-chunk: bounds f32 temporaries to ~256 KiB each
VMEM_LIMIT_BYTES = 32 * 1024 * 1024    # 2 inputs x 2 buffers x 4 MiB = 16 MiB + temporaries


def _sublane_multiple(dtype):
    """Sublane packing granule: 8 rows for 4-byte, 16 for 2-byte, 32 for 1-byte."""
    itemsize = jnp.dtype(dtype).itemsize
    return max(8, 32 // max(1, min(4, itemsize)))


def _chunk_sums(x, t):
    """Partial sums of (sigmoid(x)*t, sigmoid(x), t) reduced to (8, LANES) slabs."""
    xf = x.astype(jnp.float32)
    tf = t.astype(jnp.float32)
    # sigmoid(x) == 0.5*tanh(0.5*x) + 0.5 : one EUP transcendental per element.
    s = 0.5 * jnp.tanh(0.5 * xf) + 0.5
    g = x.shape[0] // 8
    st = (s * tf).reshape(g, 8, LANES).sum(axis=0)   # pure VPU vreg adds
    ss = s.reshape(g, 8, LANES).sum(axis=0)
    tt = tf.reshape(g, 8, LANES).sum(axis=0)
    return st, ss, tt


def _accum_rows(x_ref, t_ref, out_ref, valid_rows, chunk_rows, unroll):
    """Accumulate sums over rows [0, valid_rows) of the current tile into out_ref.

    valid_rows / chunk_rows are compile-time Python ints (valid_rows is always a
    multiple of 8), so all slices here are static or multiple-of-chunk dynamic.
    """
    num_chunks = valid_rows // chunk_rows
    rem = valid_rows % chunk_rows
    zero = jnp.zeros((8, LANES), jnp.float32)

    if num_chunks == 1 and rem == 0:
        st_a, ss_a, tt_a = _chunk_sums(x_ref[:chunk_rows, :], t_ref[:chunk_rows, :])
    elif num_chunks > 0:
        def body(i, carry):
            st_c, ss_c, tt_c = carry
            r0 = pl.multiple_of(i * chunk_rows, chunk_rows)
            st, ss, tt = _chunk_sums(x_ref[pl.ds(r0, chunk_rows), :],
                                     t_ref[pl.ds(r0, chunk_rows), :])
            return st_c + st, ss_c + ss, tt_c + tt

        st_a, ss_a, tt_a = jax.lax.fori_loop(
            0, num_chunks, body, (zero, zero, zero), unroll=unroll)
    else:
        st_a, ss_a, tt_a = zero, zero, zero

    if rem:
        r0 = num_chunks * chunk_rows
        st, ss, tt = _chunk_sums(x_ref[r0:r0 + rem, :], t_ref[r0:r0 + rem, :])
        st_a, ss_a, tt_a = st_a + st, ss_a + ss, tt_a + tt

    out_ref[0, 0] += st_a
    out_ref[0, 1] += ss_a
    out_ref[0, 2] += tt_a


def _dice_partial_kernel(x_ref, t_ref, out_ref, *, tile_rows, chunk_rows,
                         tail_valid_rows, unroll):
    """Per-split partial sums of (sigmoid(x)*t, sigmoid(x), t).

    x_ref, t_ref: (tile_rows, LANES) VMEM tiles (original dtype).
    out_ref:      (1, 3, 8, LANES) f32 output block, resident across the inner
                  ("arbitrary") grid axis -> used directly as the accumulator.
    """
    j = pl.program_id(1)

    @pl.when(j == 0)
    def _init():
        out_ref[...] = jnp.zeros_like(out_ref)

    if tail_valid_rows == tile_rows:
        # All blocks are full: single unmasked fast path.
        _accum_rows(x_ref, t_ref, out_ref, tile_rows, chunk_rows, unroll)
    else:
        # Exactly one partial tail block (its valid row count is a static int);
        # only that grid step takes the shorter static-prefix path.
        is_tail = jnp.logical_and(pl.program_id(0) == pl.num_programs(0) - 1,
                                  j == pl.num_programs(1) - 1)

        @pl.when(jnp.logical_not(is_tail))
        def _full():
            _accum_rows(x_ref, t_ref, out_ref, tile_rows, chunk_rows, unroll)

        @pl.when(is_tail)
        def _tail():
            _accum_rows(x_ref, t_ref, out_ref, tail_valid_rows, chunk_rows, unroll)


def dice_loss(inputs, targets, smooth=1.0):
    """Pallas TPU Dice loss: 1 - (2*sum(s*t)+smooth)/(sum(s)+sum(t)+smooth)."""
    xf = inputs.reshape(-1)
    tf = targets.reshape(-1)
    n = xf.shape[0]

    sub = max(_sublane_multiple(xf.dtype), _sublane_multiple(tf.dtype))
    rows_main = (n // (sub * LANES)) * sub          # sublane-packing-aligned row count
    n_main = rows_main * LANES

    inter = jnp.float32(0.0)
    s_in = jnp.float32(0.0)
    s_tg = jnp.float32(0.0)

    if rows_main > 0:
        if n_main == n:
            x2 = xf.reshape(rows_main, LANES)       # pure reshape: no copy
            t2 = tf.reshape(rows_main, LANES)
        else:
            # TODO(synk): unaligned n -> this prefix slice materializes a copy; a
            # ragged 1-D BlockSpec could avoid it if that case ever matters.
            x2 = xf[:n_main].reshape(rows_main, LANES)
            t2 = tf[:n_main].reshape(rows_main, LANES)

        x_item = jnp.dtype(xf.dtype).itemsize
        t_item = jnp.dtype(tf.dtype).itemsize
        max_item = max(x_item, t_item)

        desired_rows = TARGET_TILE_BYTES // (LANES * max_item)
        desired_rows = max(CHUNK_ROWS, (desired_rows // CHUNK_ROWS) * CHUNK_ROWS)
        tile_rows = min(desired_rows, rows_main)
        chunk_rows = min(CHUNK_ROWS, tile_rows)

        nblocks = pl.cdiv(rows_main, tile_rows)
        # 2-way split only when it divides evenly: no clamped overflow steps, no
        # masking; harmless on 1-TC chips, shards across both TCs on v7x.
        num_splits = 2 if (nblocks >= 2 and nblocks % 2 == 0) else 1
        steps_per_split = nblocks // num_splits
        tail_valid_rows = rows_main - (nblocks - 1) * tile_rows   # == tile_rows if even

        num_chunks_full = tile_rows // chunk_rows
        unroll = 4 if num_chunks_full >= 4 else True

        kernel = functools.partial(
            _dice_partial_kernel,
            tile_rows=tile_rows,
            chunk_rows=chunk_rows,
            tail_valid_rows=tail_valid_rows,
            unroll=unroll,
        )

        def block_index(c, j):
            return (c * steps_per_split + j, 0)

        cost = pl.CostEstimate(
            flops=8 * n_main,
            transcendentals=n_main,
            bytes_accessed=n_main * (x_item + t_item) + num_splits * 3 * 8 * LANES * 4,
        )

        partials = pl.pallas_call(
            kernel,
            out_shape=jax.ShapeDtypeStruct((num_splits, 3, 8, LANES), jnp.float32),
            grid_spec=pltpu.PrefetchScalarGridSpec(
                num_scalar_prefetch=0,
                grid=(num_splits, steps_per_split),
                in_specs=[
                    pl.BlockSpec((tile_rows, LANES), block_index),
                    pl.BlockSpec((tile_rows, LANES), block_index),
                ],
                out_specs=pl.BlockSpec((1, 3, 8, LANES), lambda c, j: (c, 0, 0, 0)),
            ),
            compiler_params=pltpu.CompilerParams(
                # outer axis: independent splits (dual-TC on v7x);
                # inner axis: sequential reduction into the resident output block.
                dimension_semantics=("parallel", "arbitrary"),
                vmem_limit_bytes=VMEM_LIMIT_BYTES,
            ),
            cost_estimate=cost,
        )(x2, t2)

        sums = jnp.sum(partials, axis=(0, 2, 3), dtype=jnp.float32)   # (3,)
        inter = inter + sums[0]
        s_in = s_in + sums[1]
        s_tg = s_tg + sums[2]

    if n_main < n:
        # Ragged remainder (< sub*128 elements): plain jnp, negligible cost.
        xt = xf[n_main:].astype(jnp.float32)
        tt = tf[n_main:].astype(jnp.float32)
        st = jax.nn.sigmoid(xt)
        inter = inter + jnp.sum(st * tt)
        s_in = s_in + jnp.sum(st)
        s_tg = s_tg + jnp.sum(tt)

    smooth = jnp.asarray(smooth, jnp.float32)
    dice = (2.0 * inter + smooth) / (s_in + s_tg + smooth)
    return 1.0 - dice


def dice_loss_ref(inputs, targets, smooth=1.0):
    s = jax.nn.sigmoid(inputs.astype(jnp.float32))
    t = targets.astype(jnp.float32)
    inter = jnp.sum(s * t)
    dice = (2.0 * inter + smooth) / (jnp.sum(s) + jnp.sum(t) + smooth)
    return 1.0 - dice


if __name__ == "__main__":
    key = jax.random.PRNGKey(0)
    k1, k2 = jax.random.split(key)
    # Typical segmentation shapes: logits and binary masks, NCHW.
    inputs = jax.random.normal(k1, (2, 4, 16, 16), dtype=jnp.float32)
    targets = (jax.random.uniform(k2, (2, 4, 16, 16)) > 0.5).astype(jnp.float32)

    loss = jax.block_until_ready(dice_loss(inputs, targets, smooth=1.0))
    ref = jax.block_until_ready(dice_loss_ref(inputs, targets, smooth=1.0))

    assert jnp.allclose(loss, ref, rtol=1e-5, atol=1e-6), (loss, ref)
    print("KERNEL_OK")
</pallas_src>

<mosaic_0001>
module attributes {stable_mosaic.version = 11 : i64} {
  func.func @_dice_partial_kernel(%arg0: i32, %arg1: i32, %arg2: memref<16x128xf32, #tpu.memory_space<vmem>>, %arg3: memref<16x128xf32, #tpu.memory_space<vmem>>, %arg4: memref<1x3x8x128xf32, #tpu.memory_space<vmem>>) attributes {dimension_semantics = [#tpu.dimension_semantics<parallel>, #tpu.dimension_semantics<arbitrary>], iteration_bounds = array<i64: 1, 1>, scalar_prefetch = 0 : i64, scratch_operands = 0 : i64, tpu.core_type = #tpu.core_type<tc>, window_params = [{transform_indices = @transform_0, window_bounds = array<i64: 16, 128>}, {transform_indices = @transform_1, window_bounds = array<i64: 16, 128>}, {transform_indices = @transform_2, window_bounds = array<i64: 1, 3, 8, 128>}]} {
    %c0_i32 = arith.constant 0 : i32
    %0 = arith.cmpi eq, %arg1, %c0_i32 : i32
    %1 = arith.extui %0 : i1 to i32
    %c0_i32_0 = arith.constant 0 : i32
    %2 = arith.cmpi ne, %1, %c0_i32_0 : i32
    scf.if %2 {
      %cst_31 = arith.constant 0.000000e+00 : f32
      %37 = vector.broadcast %cst_31 : f32 to vector<1x3x8x128xf32>
      %c0_32 = arith.constant 0 : index
      %c0_33 = arith.constant 0 : index
      %c0_34 = arith.constant 0 : index
      %c0_35 = arith.constant 0 : index
      %38 = vector.load %arg4[%c0_32, %c0_33, %c0_34, %c0_35] : memref<1x3x8x128xf32, #tpu.memory_space<vmem>>, vector<1x3x8x128xf32>
      tpu.vector_store %arg4[%c0_32, %c0_33, %c0_34, %c0_35], %37 {strides = array<i32>} : memref<1x3x8x128xf32, #tpu.memory_space<vmem>>, vector<1x3x8x128xf32>,
    } else {
    }
    %c0 = arith.constant 0 : index
    %c0_1 = arith.constant 0 : index
    %3 = vector.load %arg2[%c0, %c0_1] : memref<16x128xf32, #tpu.memory_space<vmem>>, vector<16x128xf32>
    %c0_2 = arith.constant 0 : index
    %c0_3 = arith.constant 0 : index
    %4 = vector.load %arg3[%c0_2, %c0_3] : memref<16x128xf32, #tpu.memory_space<vmem>>, vector<16x128xf32>
    %cst = arith.constant 5.000000e-01 : f32
    %5 = vector.broadcast %cst : f32 to vector<16x128xf32>
    %6 = arith.mulf %5, %3 : vector<16x128xf32>
    %7 = math.tanh %6 : vector<16x128xf32>
    %cst_4 = arith.constant 5.000000e-01 : f32
    %8 = vector.broadcast %cst_4 : f32 to vector<16x128xf32>
    %9 = arith.mulf %8, %7 : vector<16x128xf32>
    %cst_5 = arith.constant 5.000000e-01 : f32
    %10 = vector.broadcast %cst_5 : f32 to vector<16x128xf32>
    %11 = arith.addf %9, %10 : vector<16x128xf32>
    %12 = arith.mulf %11, %4 : vector<16x128xf32>
    %13 = vector.shape_cast %12 : vector<16x128xf32> to vector<2x8x128xf32>
    %cst_6 = arith.constant dense<0.000000e+00> : vector<8x128xf32>
    %14 = vector.multi_reduction <add>, %13, %cst_6 [0] : vector<2x8x128xf32> to vector<8x128xf32>
    %15 = vector.shape_cast %11 : vector<16x128xf32> to vector<2x8x128xf32>
    %cst_7 = arith.constant dense<0.000000e+00> : vector<8x128xf32>
    %16 = vector.multi_reduction <add>, %15, %cst_7 [0] : vector<2x8x128xf32> to vector<8x128xf32>
    %17 = vector.shape_cast %4 : vector<16x128xf32> to vector<2x8x128xf32>
    %cst_8 = arith.constant dense<0.000000e+00> : vector<8x128xf32>
    %18 = vector.multi_reduction <add>, %17, %cst_8 [0] : vector<2x8x128xf32> to vector<8x128xf32>
    %c0_9 = arith.constant 0 : index
    %c0_10 = arith.constant 0 : index
    %c0_11 = arith.constant 0 : index
    %c0_12 = arith.constant 0 : index
    %19 = vector.load %arg4[%c0_9, %c0_10, %c0_11, %c0_12] : memref<1x3x8x128xf32, #tpu.memory_space<vmem>>, vector<1x1x8x128xf32>
    %20 = vector.shape_cast %19 : vector<1x1x8x128xf32> to vector<8x128xf32>
    %21 = arith.addf %20, %14 : vector<8x128xf32>
    %c0_13 = arith.constant 0 : index
    %c0_14 = arith.constant 0 : index
    %c0_15 = arith.constant 0 : index
    %c0_16 = arith.constant 0 : index
    %22 = vector.load %arg4[%c0_13, %c0_14, %c0_15, %c0_16] : memref<1x3x8x128xf32, #tpu.memory_space<vmem>>, vector<1x1x8x128xf32>
    %23 = vector.shape_cast %22 : vector<1x1x8x128xf32> to vector<8x128xf32>
    %24 = vector.shape_cast %21 : vector<8x128xf32> to vector<1x1x8x128xf32>
    tpu.vector_store %arg4[%c0_13, %c0_14, %c0_15, %c0_16], %24 {strides = array<i32>} : memref<1x3x8x128xf32, #tpu.memory_space<vmem>>, vector<1x1x8x128xf32>,
    %c0_17 = arith.constant 0 : index
    %c1 = arith.constant 1 : index
    %c0_18 = arith.constant 0 : index
    %c0_19 = arith.constant 0 : index
    %25 = vector.load %arg4[%c0_17, %c1, %c0_18, %c0_19] : memref<1x3x8x128xf32, #tpu.memory_space<vmem>>, vector<1x1x8x128xf32>
    %26 = vector.shape_cast %25 : vector<1x1x8x128xf32> to vector<8x128xf32>
    %27 = arith.addf %26, %16 : vector<8x128xf32>
    %c0_20 = arith.constant 0 : index
    %c1_21 = arith.constant 1 : index
    %c0_22 = arith.constant 0 : index
    %c0_23 = arith.constant 0 : index
    %28 = vector.load %arg4[%c0_20, %c1_21, %c0_22, %c0_23] : memref<1x3x8x128xf32, #tpu.memory_space<vmem>>, vector<1x1x8x128xf32>
    %29 = vector.shape_cast %28 : vector<1x1x8x128xf32> to vector<8x128xf32>
    %30 = vector.shape_cast %27 : vector<8x128xf32> to vector<1x1x8x128xf32>
    tpu.vector_store %arg4[%c0_20, %c1_21, %c0_22, %c0_23], %30 {strides = array<i32>} : memref<1x3x8x128xf32, #tpu.memory_space<vmem>>, vector<1x1x8x128xf32>,
    %c0_24 = arith.constant 0 : index
    %c2 = arith.constant 2 : index
    %c0_25 = arith.constant 0 : index
    %c0_26 = arith.constant 0 : index
    %31 = vector.load %arg4[%c0_24, %c2, %c0_25, %c0_26] : memref<1x3x8x128xf32, #tpu.memory_space<vmem>>, vector<1x1x8x128xf32>
    %32 = vector.shape_cast %31 : vector<1x1x8x128xf32> to vector<8x128xf32>
    %33 = arith.addf %32, %18 : vector<8x128xf32>
    %c0_27 = arith.constant 0 : index
    %c2_28 = arith.constant 2 : index
    %c0_29 = arith.constant 0 : index
    %c0_30 = arith.constant 0 : index
    %34 = vector.load %arg4[%c0_27, %c2_28, %c0_29, %c0_30] : memref<1x3x8x128xf32, #tpu.memory_space<vmem>>, vector<1x1x8x128xf32>
    %35 = vector.shape_cast %34 : vector<1x1x8x128xf32> to vector<8x128xf32>
    %36 = vector.shape_cast %33 : vector<8x128xf32> to vector<1x1x8x128xf32>
    tpu.vector_store %arg4[%c0_27, %c2_28, %c0_29, %c0_30], %36 {strides = array<i32>} : memref<1x3x8x128xf32, #tpu.memory_space<vmem>>, vector<1x1x8x128xf32>,
    return
  }
  func.func @transform_0(%arg0: i32, %arg1: i32) -> (i32, i32) {
    %c1_i32 = arith.constant 1 : i32
    %0 = arith.muli %arg0, %c1_i32 : i32
    %1 = arith.addi %0, %arg1 : i32
    %c0_i32 = arith.constant 0 : i32
    %c0_i32_0 = arith.constant 0 : i32
    return %1, %c0_i32 : i32, i32
  }
  func.func @transform_1(%arg0: i32, %arg1: i32) -> (i32, i32) {
    %c1_i32 = arith.constant 1 : i32
    %0 = arith.muli %arg0, %c1_i32 : i32
    %1 = arith.addi %0, %arg1 : i32
    %c0_i32 = arith.constant 0 : i32
    %c0_i32_0 = arith.constant 0 : i32
    return %1, %c0_i32 : i32, i32
  }
  func.func @transform_2(%arg0: i32, %arg1: i32) -> (i32, i32, i32, i32) {
    %c0_i32 = arith.constant 0 : i32
    %c0_i32_0 = arith.constant 0 : i32
    %c0_i32_1 = arith.constant 0 : i32
    %c0_i32_2 = arith.constant 0 : i32
    return %arg0, %c0_i32, %c0_i32_0, %c0_i32_1 : i32, i32, i32, i32
  }
}

</mosaic_0001>

<llo_original>
// kernel: tpu_custom_call.1
$region0: #{tpu_custom_call.1}
  #allocation0 [shape = 'u32[]', space=smem, size = 0x4, offset = 0x4, fixed_abs, tag = 'smem constant byte address 0x4 - core index']
  #allocation1 [shape = 'u32[144,128]{1,0:T(1,128)}', space=vmem, size = 0x12000, scoped, tag = 'internal scratch']
  %s0 = inlined_call_operand.hbm [shape: f32[16,128], index: 0, kind: input, shape index: {}]
  %s1 = inlined_call_operand.hbm [shape: f32[16,128], index: 1, kind: input, shape index: {}]
  %s2 = inlined_call_operand.hbm [shape: f32[1,3,8,128], index: 2, kind: output, shape index: {}]
  %s3 = sld [smem:[#allocation0]]
  $region30: #{tpu_custom_call.1} parent=0
    _
  %s5 = ssub.s32 1, %s3
  %s6 = scalar_select 0, %s5, %s3
  $region1: #{tpu_custom_call.1} parent=0
    #allocation2 [shape = 'u8[8192]{0}', space=vmem, size = 0x2000, scoped, tag = 'input window, operand 0, single buffered']
    #allocation3 [shape = 's32[1]{0}', space=sflag, size = 0x4, scoped, tag = 'scoped memory for tpu_custom_call.1']
    #allocation4 [shape = 's32[1]{0}', space=sflag, size = 0x4, scoped, tag = 'scoped memory for tpu_custom_call.1']
    #allocation5 [shape = 'u8[8192]{0}', space=vmem, size = 0x2000, scoped, tag = 'input window, operand 1, single buffered']
    #allocation6 [shape = 's32[1]{0}', space=sflag, size = 0x4, scoped, tag = 'scoped memory for tpu_custom_call.1']
    #allocation7 [shape = 'u8[12288]{0}', space=vmem, size = 0x3000, scoped, tag = 'output window, operand 0, single buffered']
    %7 = vsyncpa [#allocation3], 0
    %8 = vsyncpa [#allocation6], 0
    %9 = vsyncpa [#allocation4], 0
    // Predicated region
    $region2: #{tpu_custom_call.1} parent=1 // pred_check
      _
    $region3: #{tpu_custom_call.1} parent=1 // pred_check_branch
      %11 = sbr.rel (0) target = $region5
    $region4: #{tpu_custom_call.1} parent=1 // pred_region
      %s12 = sadd.s32 0, 0
      %s13 = smul.u32 2, %s12
      %s15 = ssub.s32 256, 256
      %16 = vsyncadd [#allocation3], %s15
      %s17 = smul.addr %s13, 128
      %s18 = scalar_lea.hbm %s0, %s17
      %s19 = sshll.u32 [#allocation2], 4
      %s20 = int_to_ptr.vmem [resolvable:$true] %s19
      %25 = dma.hbm_to_vmem [thread:$0]  %s18, 256, %s20, [#allocation3], 128, 128, 8
    $region5: #{tpu_custom_call.1} parent=1 // pred_fallthru
      _
    // Predicated region
    $region6: #{tpu_custom_call.1} parent=1 // pred_check
      _
    $region7: #{tpu_custom_call.1} parent=1 // pred_check_branch
      %27 = sbr.rel (0) target = $region9
    $region8: #{tpu_custom_call.1} parent=1 // pred_region
      %s28 = sadd.s32 0, 0
      %s29 = smul.u32 2, %s28
      %s31 = ssub.s32 256, 256
      %32 = vsyncadd [#allocation6], %s31
      %s33 = smul.addr %s29, 128
      %s34 = scalar_lea.hbm %s1, %s33
      %s35 = sshll.u32 [#allocation5], 4
      %s36 = int_to_ptr.vmem [resolvable:$true] %s35
      %41 = dma.hbm_to_vmem [thread:$0]  %s34, 256, %s36, [#allocation6], 128, 128, 8
    $region9: #{tpu_custom_call.1} parent=1 // pred_fallthru
      _
    // Predicated region
    $region10: #{tpu_custom_call.1} parent=1 // pred_check
      _
    $region11: #{tpu_custom_call.1} parent=1 // pred_check_branch
      %43 = sbr.rel (0) target = $region13
    $region12: #{tpu_custom_call.1} parent=1 // pred_region
      %44 = dma.done [#allocation3], 256
    $region13: #{tpu_custom_call.1} parent=1 // pred_fallthru
      _
    // Predicated region
    $region14: #{tpu_custom_call.1} parent=1 // pred_check
      _
    $region15: #{tpu_custom_call.1} parent=1 // pred_check_branch
      %46 = sbr.rel (0) target = $region17
    $region16: #{tpu_custom_call.1} parent=1 // pred_region
      %47 = dma.done [#allocation6], 256
    $region17: #{tpu_custom_call.1} parent=1 // pred_fallthru
      _
    %s48 = sadd.s32 0, 0
    %s49 = smul.u32 2, %s48
    %s50 = sadd.s32 0, 0
    %s51 = smul.u32 2, %s50
    %p52 = scmp.eq.s32.totalorder 0, 0
    // Predicated region
    $region18: #{tpu_custom_call.1} parent=1 // pred_check
      %p53 = pneg %p52
    $region19: #{tpu_custom_call.1} parent=1 // pred_check_branch
      %55 = sbr.rel (%p53) target = $region21
    $region20: #{tpu_custom_call.1} parent=1 // pred_region
      %56 = vst [vmem:[#allocation7] sm:$0xff] 0.0
      %57 = vst [vmem:[#allocation7 + $0x8] sm:$0xff] 0.0
      %58 = vst [vmem:[#allocation7 + $0x10] sm:$0xff] 0.0
    $region21: #{tpu_custom_call.1} parent=1 // pred_fallthru
      _
    %v59 = vld [vmem:[#allocation2] sm:$0xff]
    %v60 = vld [vmem:[#allocation2 + $0x8] sm:$0xff]
    %v61 = vld [vmem:[#allocation5] sm:$0xff]
    %v62 = vld [vmem:[#allocation5 + $0x8] sm:$0xff]
    %v63 = vmul.f32 %v59, 0.5
    %v64 = vmul.f32 %v60, 0.5
    %v65 = vtanh.pop %v63
    %v66 = vtanh.pop %v64
    %v67 = vmul.f32 %v65, 0.5
    %v68 = vmul.f32 %v66, 0.5
    %v69 = vadd.f32 %v67, 0.5
    %v70 = vadd.f32 %v68, 0.5
    %v71 = vmul.f32 %v69, %v61
    %v72 = vmul.f32 %v70, %v62
    %v73 = vadd.f32 %v71, %v72
    %v74 = vadd.f32 %v69, %v70
    %v75 = vadd.f32 %v61, %v62
    %v76 = vld [vmem:[#allocation7] sm:$0xff]
    %v77 = vadd.f32 %v76, %v73
    %78 = vst [vmem:[#allocation7] sm:$0xff] %v77
    %s79 = scalar_lea.vmem [#allocation7], 8
    %v80 = vld [vmem:[%s79] sm:$0xff]
    %v81 = vadd.f32 %v80, %v74
    %82 = vst [vmem:[%s79] sm:$0xff] %v81
    %s83 = scalar_lea.vmem [#allocation7], 16
    %v84 = vld [vmem:[%s83] sm:$0xff]
    %v85 = vadd.f32 %v84, %v75
    %86 = vst [vmem:[%s83] sm:$0xff] %v85
    // Predicated region
    $region22: #{tpu_custom_call.1} parent=1 // pred_check
      _
    $region23: #{tpu_custom_call.1} parent=1 // pred_check_branch
      %88 = sbr.rel (0) target = $region25
    $region24: #{tpu_custom_call.1} parent=1 // pred_region
      %s90 = ssub.s32 384, 384
      %91 = vsyncadd [#allocation4], %s90
      %s92 = sshll.u32 [#allocation7], 4
      %s93 = int_to_ptr.vmem [resolvable:$true] %s92
      %98 = dma.vmem_to_hbm [thread:$0]  %s93, 384, %s2, [#allocation4], 128, 128, 8
    $region25: #{tpu_custom_call.1} parent=1 // pred_fallthru
      _
    // Predicated region
    $region26: #{tpu_custom_call.1} parent=1 // pred_check
      _
    $region27: #{tpu_custom_call.1} parent=1 // pred_check_branch
      %100 = sbr.rel (0) target = $region29
    $region28: #{tpu_custom_call.1} parent=1 // pred_region
      %101 = dma.done [#allocation4], 384
    $region29: #{tpu_custom_call.1} parent=1 // pred_fallthru
      _
    %102 = vsyncpa [#allocation3], 1
    %103 = vsyncpa [#allocation6], 1
    %104 = vsyncpa [#allocation4], 1

</llo_original>
